<compile_context>
chip_gen: v7x
topology: tpu7x:2x2x1
jax: 0.10.0
libtpu: 0.0.40
codegen_flags: <defaults>
</compile_context>

<pallas_src>
import functools

import jax
import jax.numpy as jnp
from jax.experimental import pallas as pl
from jax.experimental.pallas import tpu as pltpu

_LANES = 128
_SUBLANE = 8


def _round_up(x, m):
    return ((x + m - 1) // m) * m


def _mlp_critic_kernel(x_ref, w1_ref, b1_ref, w2_ref, b2_ref, w3_ref, b3_ref,
                       o_ref):
    x = x_ref[...]                      # compute dtype (bf16-friendly)
    dt = x.dtype

    # fc1 + ReLU  (MXU matmul, f32 accumulation; bias/ReLU in f32 on the VPU)
    h1 = jnp.dot(x, w1_ref[...], preferred_element_type=jnp.float32)
    h1 = jnp.maximum(h1 + b1_ref[...].astype(jnp.float32), 0.0)

    # fc2 + ReLU
    h2 = jnp.dot(h1.astype(dt), w2_ref[...], preferred_element_type=jnp.float32)
    h2 = jnp.maximum(h2 + b2_ref[...].astype(jnp.float32), 0.0)

    # fc3: lane-dense MXU matmul (out dim pre-padded to a multiple of 128 in
    # prepare_params) -> unmasked full-lane output stores.
    val = jnp.dot(h2.astype(dt), w3_ref[...], preferred_element_type=jnp.float32)
    val = val + b3_ref[...].astype(jnp.float32)

    o_ref[...] = val.astype(o_ref.dtype)


def prepare_params(w1, b1, w2, b2, w3, b3, compute_dtype=None):
    """One-time parameter prep — call OUTSIDE the hot loop.

    * Casts every parameter to the compute dtype once (pass jnp.bfloat16 for
      single-pass bf16 MXU + halved weight DMA/VMEM; default keeps f32).
    * Zero-pads fc3's output dim up to a lane-dense multiple of 128 so the
      final matmul and output writeback fill all 128 lanes.  Exact: the padded
      weight columns / bias entries are zero and are sliced off after the call.
    Returns (params_tuple, out_dim).
    """
    out_dim = w3.shape[1]
    out_p = max(_LANES, _round_up(out_dim, _LANES))
    if compute_dtype is None:
        compute_dtype = w1.dtype
    if out_p != out_dim:
        w3 = jnp.pad(w3, ((0, 0), (0, out_p - out_dim)))
        b3 = jnp.pad(b3, ((0, 0), (0, out_p - out_dim)))
    params = tuple(a.astype(compute_dtype) for a in (w1, b1, w2, b2, w3, b3))
    return params, out_dim


def _pick_block_b(B, bytes_per_row, resident_bytes, cap=512,
                  vmem_budget=24 * 1024 * 1024):
    """Batch tile: whole batch if small, else <=cap rows, shrunk to fit VMEM."""
    if B <= cap:
        return B
    block_b = cap
    # Shrink until resident weights + double-buffered x/out tiles fit budget.
    while block_b > _SUBLANE and (
            resident_bytes + 2 * block_b * bytes_per_row > vmem_budget):
        block_b //= 2
    block_b = max(block_b, _SUBLANE)
    # Best effort: even number of tiles so both of v7x's TensorCores get work.
    n = -(-B // block_b)
    if n > 1 and n % 2 == 1 and block_b >= 2 * _SUBLANE:
        half = _round_up(block_b // 2, _SUBLANE)
        if -(-B // half) % 2 == 0:
            block_b = half
    return block_b


@functools.partial(jax.jit, static_argnames=("out_dim", "block_b"))
def mlp_critic_forward(x, w1, b1, w2, b2, w3p, b3p, *, out_dim=None,
                       block_b=None):
    B, in_dim = x.shape
    hid = w1.shape[1]
    assert w1.shape == (in_dim, hid)
    assert w2.shape == (hid, hid)
    out_p = w3p.shape[1]
    assert w3p.shape == (hid, out_p) and out_p % _LANES == 0
    if out_dim is None:
        out_dim = out_p

    # Dtype contract: params define the compute dtype; cast x (cheap), never
    # the weights, per-call.
    cdt = w1.dtype
    x = x.astype(cdt)
    x_is = jnp.dtype(cdt).itemsize

    # Conservative VMEM accounting: weights/biases counted double-buffered.
    resident = 2 * sum(int(a.size) * a.dtype.itemsize
                       for a in (w1, b1, w2, b2, w3p, b3p))
    row_bytes = (in_dim + out_p) * x_is + 2 * hid * 4   # x/out tiles + f32 acts

    if block_b is None:
        block_b = _pick_block_b(B, row_bytes, resident)
    elif block_b >= B:
        block_b = B
    else:
        block_b = max(_round_up(block_b, _SUBLANE), _SUBLANE)

    # Pad the batch up to a whole number of tiles; extra rows are independent
    # garbage that gets sliced off (avoids 1-row blocks / prime-B grids).
    if block_b >= B:
        block_b, b_pad = B, B
    else:
        b_pad = _round_up(B, block_b)
    if b_pad != B:
        x = jnp.pad(x, ((0, b_pad - B), (0, 0)))
    grid = (b_pad // block_b,)

    # Weights/biases use constant index_maps (grid-invariant, VMEM-resident);
    # only x and the output stream per tile.  Full-array blocks need no
    # (8,128) divisibility, so the hidden dim stays unpadded.
    in_specs = [
        pl.BlockSpec((block_b, in_dim), lambda i: (i, 0)),   # x  (streamed)
        pl.BlockSpec((in_dim, hid), lambda i: (0, 0)),       # w1 (resident)
        pl.BlockSpec((1, hid), lambda i: (0, 0)),            # b1
        pl.BlockSpec((hid, hid), lambda i: (0, 0)),          # w2
        pl.BlockSpec((1, hid), lambda i: (0, 0)),            # b2
        pl.BlockSpec((hid, out_p), lambda i: (0, 0)),        # w3 (lane-padded)
        pl.BlockSpec((1, out_p), lambda i: (0, 0)),          # b3 (lane-padded)
    ]
    out_specs = pl.BlockSpec((block_b, out_p), lambda i: (i, 0))

    # Explicit VMEM budget (raises v5e's 16 MiB scoped default, stays within
    # v7x's 64 MiB physical).
    # TODO(synk): if w2 alone approaches VMEM (hid >= ~4096 bf16), tile fc2's
    # output columns on a second grid axis instead of keeping w2 resident.
    needed = resident + 2 * block_b * (in_dim + out_p) * x_is \
        + 2 * block_b * hid * 4
    vmem_limit = int(min(max(2 * needed, 32 * 1024 * 1024), 64 * 1024 * 1024))

    # Advisory cost (padded shapes, actual itemsizes) so XLA schedules
    # neighbors around this small custom call.
    flops = 2 * b_pad * (in_dim * hid + hid * hid + hid * out_p)
    bytes_accessed = int(b_pad * in_dim * x_is + resident // 2
                         + b_pad * out_p * x_is)
    cost = pl.CostEstimate(flops=flops, transcendentals=0,
                           bytes_accessed=bytes_accessed)

    # A 1-step grid has nothing to shard across v7x's 2 TCs.
    semantics = ("parallel",) if grid[0] > 1 else ("arbitrary",)

    out = pl.pallas_call(
        _mlp_critic_kernel,
        out_shape=jax.ShapeDtypeStruct((b_pad, out_p), cdt),
        grid_spec=pltpu.PrefetchScalarGridSpec(
            num_scalar_prefetch=0,
            grid=grid,
            in_specs=in_specs,
            out_specs=out_specs,
        ),
        compiler_params=pltpu.CompilerParams(
            dimension_semantics=semantics,
            vmem_limit_bytes=vmem_limit,
        ),
        cost_estimate=cost,
    )(x, w1, b1, w2, b2, w3p, b3p)

    return out[:B, :out_dim]


def init_linear_params(key, fan_in, fan_out):
    """Deterministic init mimicking nn.Linear default (uniform +-1/sqrt(fan_in))."""
    kw, kb = jax.random.split(key)
    bound = 1.0 / jnp.sqrt(jnp.asarray(fan_in, jnp.float32))
    # Stored as [in, out] so the kernel computes x @ W + b directly.
    w = jax.random.uniform(kw, (fan_in, fan_out), jnp.float32, -bound, bound)
    b = jax.random.uniform(kb, (1, fan_out), jnp.float32, -bound, bound)
    return w, b


def reference_forward(x, w1, b1, w2, b2, w3, b3):
    hp = jax.lax.Precision.HIGHEST
    h1 = jnp.maximum(jnp.dot(x, w1, precision=hp) + b1, 0.0)
    h2 = jnp.maximum(jnp.dot(h1, w2, precision=hp) + b2, 0.0)
    return jnp.dot(h2, w3, precision=hp) + b3


if __name__ == "__main__":
    # Shapes consistent with the module:
    #   input_shape=24, critic_hidden_dim=32, output_shape=1, batch=16
    B, IN_DIM, HID, OUT_DIM = 16, 24, 32, 1

    key = jax.random.PRNGKey(0)
    k_x, k1, k2, k3, k_x2 = jax.random.split(key, 5)

    x = jax.random.normal(k_x, (B, IN_DIM), jnp.float32)
    w1, b1 = init_linear_params(k1, IN_DIM, HID)
    w2, b2 = init_linear_params(k2, HID, HID)
    w3, b3 = init_linear_params(k3, HID, OUT_DIM)

    # One-time param prep (outside the hot path).
    params, out_dim = prepare_params(w1, b1, w2, b2, w3, b3,
                                     compute_dtype=jnp.float32)
    params = jax.block_until_ready(params)

    # Small batch: single-tile grid=(1,).
    val = mlp_critic_forward(x, *params, out_dim=out_dim)
    val = jax.block_until_ready(val)
    ref = reference_forward(x, w1, b1, w2, b2, w3, b3)
    assert val.shape == (B, OUT_DIM)
    # Tolerance covers MXU bf16-pass matmuls vs. the HIGHEST-precision reference.
    assert jnp.allclose(val, ref, atol=2e-2, rtol=2e-2), "mismatch vs reference"

    # Awkward batch (B=100, forced small tile): exercises batch padding,
    # a multi-step parallel grid, and the lane-dense output slice.
    B2 = 100
    x2 = jax.random.normal(k_x2, (B2, IN_DIM), jnp.float32)
    val2 = mlp_critic_forward(x2, *params, out_dim=out_dim, block_b=32)
    val2 = jax.block_until_ready(val2)
    ref2 = reference_forward(x2, w1, b1, w2, b2, w3, b3)
    assert val2.shape == (B2, OUT_DIM)
    assert jnp.allclose(val2, ref2, atol=2e-2, rtol=2e-2), "mismatch vs reference (padded batch)"

    print("KERNEL_OK")
</pallas_src>

<mosaic_0001>
module attributes {stable_mosaic.version = 11 : i64} {
  func.func @_mlp_critic_kernel(%arg0: i32, %arg1: memref<16x24xf32, #tpu.memory_space<vmem>>, %arg2: memref<24x32xf32, #tpu.memory_space<vmem>>, %arg3: memref<1x32xf32, #tpu.memory_space<vmem>>, %arg4: memref<32x32xf32, #tpu.memory_space<vmem>>, %arg5: memref<1x32xf32, #tpu.memory_space<vmem>>, %arg6: memref<32x128xf32, #tpu.memory_space<vmem>>, %arg7: memref<1x128xf32, #tpu.memory_space<vmem>>, %arg8: memref<16x128xf32, #tpu.memory_space<vmem>>) attributes {dimension_semantics = [#tpu.dimension_semantics<arbitrary>], iteration_bounds = array<i64: 1>, scalar_prefetch = 0 : i64, scratch_operands = 0 : i64, tpu.core_type = #tpu.core_type<tc>, window_params = [{transform_indices = @transform_0, window_bounds = array<i64: 16, 24>}, {pipeline_mode = #tpu.pipeline_mode<synchronous>, transform_indices = @transform_1, window_bounds = array<i64: 24, 32>}, {pipeline_mode = #tpu.pipeline_mode<synchronous>, transform_indices = @transform_2, window_bounds = array<i64: 1, 32>}, {pipeline_mode = #tpu.pipeline_mode<synchronous>, transform_indices = @transform_3, window_bounds = array<i64: 32, 32>}, {pipeline_mode = #tpu.pipeline_mode<synchronous>, transform_indices = @transform_4, window_bounds = array<i64: 1, 32>}, {pipeline_mode = #tpu.pipeline_mode<synchronous>, transform_indices = @transform_5, window_bounds = array<i64: 32, 128>}, {pipeline_mode = #tpu.pipeline_mode<synchronous>, transform_indices = @transform_6, window_bounds = array<i64: 1, 128>}, {transform_indices = @transform_7, window_bounds = array<i64: 16, 128>}]} {
    %c0 = arith.constant 0 : index
    %c0_0 = arith.constant 0 : index
    %0 = vector.load %arg1[%c0, %c0_0] : memref<16x24xf32, #tpu.memory_space<vmem>>, vector<16x24xf32>
    %c0_1 = arith.constant 0 : index
    %c0_2 = arith.constant 0 : index
    %1 = vector.load %arg2[%c0_1, %c0_2] : memref<24x32xf32, #tpu.memory_space<vmem>>, vector<24x32xf32>
    %cst = arith.constant dense<0.000000e+00> : vector<16x32xf32>
    %2 = tpu.matmul %0, %1, %cst {dimension_numbers = #tpu.dot_dimension_numbers<[1], [0], [0], [1], [0, 0, 1, 1], [], []>} : vector<16x24xf32>, vector<24x32xf32>, vector<16x32xf32> -> vector<16x32xf32>
    %c0_3 = arith.constant 0 : index
    %c0_4 = arith.constant 0 : index
    %3 = vector.load %arg3[%c0_3, %c0_4] : memref<1x32xf32, #tpu.memory_space<vmem>>, vector<1x32xf32>
    %4 = vector.broadcast %3 : vector<1x32xf32> to vector<16x32xf32>
    %5 = arith.addf %2, %4 : vector<16x32xf32>
    %cst_5 = arith.constant 0.000000e+00 : f32
    %6 = vector.broadcast %cst_5 : f32 to vector<16x32xf32>
    %7 = arith.maximumf %5, %6 : vector<16x32xf32>
    %c0_6 = arith.constant 0 : index
    %c0_7 = arith.constant 0 : index
    %8 = vector.load %arg4[%c0_6, %c0_7] : memref<32x32xf32, #tpu.memory_space<vmem>>, vector<32x32xf32>
    %cst_8 = arith.constant dense<0.000000e+00> : vector<16x32xf32>
    %9 = tpu.matmul %7, %8, %cst_8 {dimension_numbers = #tpu.dot_dimension_numbers<[1], [0], [0], [1], [0, 0, 1, 1], [], []>} : vector<16x32xf32>, vector<32x32xf32>, vector<16x32xf32> -> vector<16x32xf32>
    %c0_9 = arith.constant 0 : index
    %c0_10 = arith.constant 0 : index
    %10 = vector.load %arg5[%c0_9, %c0_10] : memref<1x32xf32, #tpu.memory_space<vmem>>, vector<1x32xf32>
    %11 = vector.broadcast %10 : vector<1x32xf32> to vector<16x32xf32>
    %12 = arith.addf %9, %11 : vector<16x32xf32>
    %cst_11 = arith.constant 0.000000e+00 : f32
    %13 = vector.broadcast %cst_11 : f32 to vector<16x32xf32>
    %14 = arith.maximumf %12, %13 : vector<16x32xf32>
    %c0_12 = arith.constant 0 : index
    %c0_13 = arith.constant 0 : index
    %15 = vector.load %arg6[%c0_12, %c0_13] : memref<32x128xf32, #tpu.memory_space<vmem>>, vector<32x128xf32>
    %cst_14 = arith.constant dense<0.000000e+00> : vector<16x128xf32>
    %16 = tpu.matmul %14, %15, %cst_14 {dimension_numbers = #tpu.dot_dimension_numbers<[1], [0], [0], [1], [0, 0, 1, 1], [], []>} : vector<16x32xf32>, vector<32x128xf32>, vector<16x128xf32> -> vector<16x128xf32>
    %c0_15 = arith.constant 0 : index
    %c0_16 = arith.constant 0 : index
    %17 = vector.load %arg7[%c0_15, %c0_16] : memref<1x128xf32, #tpu.memory_space<vmem>>, vector<1x128xf32>
    %18 = vector.broadcast %17 : vector<1x128xf32> to vector<16x128xf32>
    %19 = arith.addf %16, %18 : vector<16x128xf32>
    %c0_17 = arith.constant 0 : index
    %c0_18 = arith.constant 0 : index
    %20 = vector.load %arg8[%c0_17, %c0_18] : memref<16x128xf32, #tpu.memory_space<vmem>>, vector<16x128xf32>
    tpu.vector_store %arg8[%c0_17, %c0_18], %19 {strides = array<i32>} : memref<16x128xf32, #tpu.memory_space<vmem>>, vector<16x128xf32>,
    return
  }
  func.func @transform_0(%arg0: i32) -> (i32, i32) {
    %c0_i32 = arith.constant 0 : i32
    %c0_i32_0 = arith.constant 0 : i32
    return %arg0, %c0_i32 : i32, i32
  }
  func.func @transform_1(%arg0: i32) -> (i32, i32) {
    %c0_i32 = arith.constant 0 : i32
    %c0_i32_0 = arith.constant 0 : i32
    %c0_i32_1 = arith.constant 0 : i32
    return %c0_i32, %c0_i32_0 : i32, i32
  }
  func.func @transform_2(%arg0: i32) -> (i32, i32) {
    %c0_i32 = arith.constant 0 : i32
    %c0_i32_0 = arith.constant 0 : i32
    %c0_i32_1 = arith.constant 0 : i32
    return %c0_i32, %c0_i32_0 : i32, i32
  }
  func.func @transform_3(%arg0: i32) -> (i32, i32) {
    %c0_i32 = arith.constant 0 : i32
    %c0_i32_0 = arith.constant 0 : i32
    %c0_i32_1 = arith.constant 0 : i32
    return %c0_i32, %c0_i32_0 : i32, i32
  }
  func.func @transform_4(%arg0: i32) -> (i32, i32) {
    %c0_i32 = arith.constant 0 : i32
    %c0_i32_0 = arith.constant 0 : i32
    %c0_i32_1 = arith.constant 0 : i32
    return %c0_i32, %c0_i32_0 : i32, i32
  }
  func.func @transform_5(%arg0: i32) -> (i32, i32) {
    %c0_i32 = arith.constant 0 : i32
    %c0_i32_0 = arith.constant 0 : i32
    %c0_i32_1 = arith.constant 0 : i32
    return %c0_i32, %c0_i32_0 : i32, i32
  }
  func.func @transform_6(%arg0: i32) -> (i32, i32) {
    %c0_i32 = arith.constant 0 : i32
    %c0_i32_0 = arith.constant 0 : i32
    %c0_i32_1 = arith.constant 0 : i32
    return %c0_i32, %c0_i32_0 : i32, i32
  }
  func.func @transform_7(%arg0: i32) -> (i32, i32) {
    %c0_i32 = arith.constant 0 : i32
    %c0_i32_0 = arith.constant 0 : i32
    return %arg0, %c0_i32 : i32, i32
  }
}

</mosaic_0001>

<llo_original>
// kernel: mlp_critic_forward.1
$region0: #{mlp_critic_forward.1}
  #allocation0 [shape = 'u32[]', space=smem, size = 0x4, offset = 0x4, fixed_abs, tag = 'smem constant byte address 0x4 - core index']
  #allocation1 [shape = 'u32[144,128]{1,0:T(1,128)}', space=vmem, size = 0x12000, scoped, tag = 'internal scratch']
  %s0 = inlined_call_operand.hbm [shape: f32[16,24], index: 0, kind: input, shape index: {}]
  %s1 = inlined_call_operand.hbm [shape: f32[24,32], index: 1, kind: input, shape index: {}]
  %s2 = inlined_call_operand.vmem [shape: f32[1,32], index: 2, kind: input, shape index: {}]
  %s3 = inlined_call_operand.hbm [shape: f32[32,32], index: 3, kind: input, shape index: {}]
  %s4 = inlined_call_operand.vmem [shape: f32[1,32], index: 4, kind: input, shape index: {}]
  %s5 = inlined_call_operand.hbm [shape: f32[32,128], index: 5, kind: input, shape index: {}]
  %s6 = inlined_call_operand.vmem [shape: f32[1,128], index: 6, kind: input, shape index: {}]
  %s7 = inlined_call_operand.vmem [shape: f32[16,128], index: 7, kind: output, shape index: {}]
  %s8 = sld [smem:[#allocation0]]
  $region54: #{mlp_critic_forward.1} parent=0
    _
  %s10 = ssub.s32 1, %s8
  %s11 = scalar_select 0, %s10, %s8
  $region1: #{mlp_critic_forward.1} parent=0
    #allocation2 [shape = 'u8[8192]{0}', space=vmem, size = 0x2000, scoped, tag = 'input window, operand 0, single buffered']
    #allocation3 [shape = 's32[1]{0}', space=sflag, size = 0x4, scoped, tag = 'scoped memory for mlp_critic_forward.1']
    #allocation4 [shape = 'u8[12288]{0}', space=vmem, size = 0x3000, scoped, tag = 'input window, operand 1, single buffered']
    #allocation5 [shape = 's32[1]{0}', space=sflag, size = 0x4, scoped, tag = 'scoped memory for mlp_critic_forward.1']
    #allocation6 [shape = 'u8[16384]{0}', space=vmem, size = 0x4000, scoped, tag = 'input window, operand 3, single buffered']
    #allocation7 [shape = 'u8[16384]{0}', space=vmem, size = 0x4000, scoped, tag = 'input window, operand 5, single buffered']
    #allocation8 [shape = 's32[1]{0}', space=sflag, size = 0x4, scoped, tag = 'scoped memory for mlp_critic_forward.1']
    %12 = vsyncpa [#allocation3], 0
    %13 = vsyncpa [#allocation5], 0
    %14 = vsyncpa [#allocation8], 0
    // Predicated region
    $region2: #{mlp_critic_forward.1} parent=1 // pred_check
      _
    $region3: #{mlp_critic_forward.1} parent=1 // pred_check_branch
      %16 = sbr.rel (0) target = $region5
    $region4: #{mlp_critic_forward.1} parent=1 // pred_region
      %s18 = ssub.s32 256, 256
      %19 = vsyncadd [#allocation3], %s18
      %s20 = sshll.u32 [#allocation2], 4
      %s21 = int_to_ptr.vmem [resolvable:$true] %s20
      %26 = dma.hbm_to_vmem [thread:$0]  %s0, 256, %s21, [#allocation3], 128, 128, 8
    $region5: #{mlp_critic_forward.1} parent=1 // pred_fallthru
      _
    // Predicated region
    $region6: #{mlp_critic_forward.1} parent=1 // pred_check
      _
    $region7: #{mlp_critic_forward.1} parent=1 // pred_check_branch
      %28 = sbr.rel (0) target = $region9
    $region8: #{mlp_critic_forward.1} parent=1 // pred_region
      %s30 = ssub.s32 384, 384
      %31 = vsyncadd [#allocation5], %s30
      %s32 = sshll.u32 [#allocation4], 4
      %s33 = int_to_ptr.vmem [resolvable:$true] %s32
      %38 = dma.hbm_to_vmem [thread:$0]  %s1, 384, %s33, [#allocation5], 128, 128, 8
    $region9: #{mlp_critic_forward.1} parent=1 // pred_fallthru
      _
    // Predicated region
    $region10: #{mlp_critic_forward.1} parent=1 // pred_check
      _
    $region11: #{mlp_critic_forward.1} parent=1 // pred_check_branch
      %40 = sbr.rel (0) target = $region13
    $region12: #{mlp_critic_forward.1} parent=1 // pred_region
      _
    $region13: #{mlp_critic_forward.1} parent=1 // pred_fallthru
      _
    // Predicated region
    $region14: #{mlp_critic_forward.1} parent=1 // pred_check
      _
    $region15: #{mlp_critic_forward.1} parent=1 // pred_check_branch
      %42 = sbr.rel (0) target = $region17
    $region16: #{mlp_critic_forward.1} parent=1 // pred_region
      %s44 = ssub.s32 512, 512
      %45 = vsyncadd [#allocation5], %s44
      %s46 = sshll.u32 [#allocation6], 4
      %s47 = int_to_ptr.vmem [resolvable:$true] %s46
      %52 = dma.hbm_to_vmem [thread:$0]  %s3, 512, %s47, [#allocation5], 128, 128, 8
    $region17: #{mlp_critic_forward.1} parent=1 // pred_fallthru
      _
    // Predicated region
    $region18: #{mlp_critic_forward.1} parent=1 // pred_check
      _
    $region19: #{mlp_critic_forward.1} parent=1 // pred_check_branch
      %54 = sbr.rel (0) target = $region21
    $region20: #{mlp_critic_forward.1} parent=1 // pred_region
      _
    $region21: #{mlp_critic_forward.1} parent=1 // pred_fallthru
      _
    // Predicated region
    $region22: #{mlp_critic_forward.1} parent=1 // pred_check
      _
    $region23: #{mlp_critic_forward.1} parent=1 // pred_check_branch
      %56 = sbr.rel (0) target = $region25
    $region24: #{mlp_critic_forward.1} parent=1 // pred_region
      %s58 = ssub.s32 512, 512
      %59 = vsyncadd [#allocation8], %s58
      %s60 = sshll.u32 [#allocation7], 4
      %s61 = int_to_ptr.vmem [resolvable:$true] %s60
      %66 = dma.hbm_to_vmem [thread:$0]  %s5, 512, %s61, [#allocation8], 128, 128, 8
    $region25: #{mlp_critic_forward.1} parent=1 // pred_fallthru
      _
    // Predicated region
    $region26: #{mlp_critic_forward.1} parent=1 // pred_check
      _
    $region27: #{mlp_critic_forward.1} parent=1 // pred_check_branch
      %68 = sbr.rel (0) target = $region29
    $region28: #{mlp_critic_forward.1} parent=1 // pred_region
      _
    $region29: #{mlp_critic_forward.1} parent=1 // pred_fallthru
      _
    // Predicated region
    $region30: #{mlp_critic_forward.1} parent=1 // pred_check
      _
    $region31: #{mlp_critic_forward.1} parent=1 // pred_check_branch
      %70 = sbr.rel (0) target = $region33
    $region32: #{mlp_critic_forward.1} parent=1 // pred_region
      %71 = dma.done [#allocation3], 256
    $region33: #{mlp_critic_forward.1} parent=1 // pred_fallthru
      _
    // Predicated region
    $region34: #{mlp_critic_forward.1} parent=1 // pred_check
      _
    $region35: #{mlp_critic_forward.1} parent=1 // pred_check_branch
      %73 = sbr.rel (0) target = $region37
    $region36: #{mlp_critic_forward.1} parent=1 // pred_region
      %74 = dma.done [#allocation5], 384
    $region37: #{mlp_critic_forward.1} parent=1 // pred_fallthru
      _
    // Predicated region
    $region38: #{mlp_critic_forward.1} parent=1 // pred_check
      _
    $region39: #{mlp_critic_forward.1} parent=1 // pred_check_branch
      %76 = sbr.rel (0) target = $region41
    $region40: #{mlp_critic_forward.1} parent=1 // pred_region
      %77 = dma.done [#allocation5], 512
    $region41: #{mlp_critic_forward.1} parent=1 // pred_fallthru
      _
    // Predicated region
    $region42: #{mlp_critic_forward.1} parent=1 // pred_check
      _
    $region43: #{mlp_critic_forward.1} parent=1 // pred_check_branch
      %79 = sbr.rel (0) target = $region45
    $region44: #{mlp_critic_forward.1} parent=1 // pred_region
      %80 = dma.done [#allocation8], 512
    $region45: #{mlp_critic_forward.1} parent=1 // pred_fallthru
      _
    %v81 = vld [vmem:[#allocation2] sm:$0xff]
    %v82 = vld [vmem:[#allocation2 + $0x8] sm:$0xff]
    %v83 = vld [vmem:[#allocation4] sm:$0xff]
    %v84 = vld [vmem:[#allocation4 + $0x8] sm:$0xff]
    %v85 = vld [vmem:[#allocation4 + $0x10] sm:$0xff]
    %v86 = vld [vmem:[%s2] sm:$0x1]
    %v88 = vlaneseq
    %v89 = vshrl.u32 %v88, 7
    %v90 = vsub.s32 0, %v89
    %v91 = vrot.slane %v86, %v90
    %vm93 = vcmask 195584
    %v95 = vsel %vm93, %v81, 0
    %v98 = vsel %vm93, %v82, 0
    %100 = vmatprep.subr.mxu0 0.0
    %101 = vmatpush1.msra.mxu0 %v83
    %102 = vmatprep.subr.mxu0 0.0
    %103 = vmatpush1.msra.mxu0 %v84
    %104 = vmatprep.subr.mxu0 0.0
    %105 = vmatpush1.msra.mxu0 %v85
    %106 = vmatprep.subr.mxu0 0.0
    %107 = vmatpush1.msra.mxu0 0.0
    %108 = vmatprep.subr.mxu0 0.0
    %109 = vmatpush1.msra.mxu0 0.0
    %110 = vmatprep.subr.mxu0 0.0
    %111 = vmatpush1.msra.mxu0 0.0
    %112 = vmatprep.subr.mxu0 0.0
    %113 = vmatpush1.msra.mxu0 0.0
    %114 = vmatprep.subr.mxu0 0.0
    %115 = vmatpush1.msra.mxu0 0.0
    %116 = vmatprep.subr.mxu0 0.0
    %117 = vmatpush1.msra.mxu0 0.0
    %118 = vmatprep.subr.mxu0 0.0
    %119 = vmatpush1.msra.mxu0 0.0
    %120 = vmatprep.subr.mxu0 0.0
    %121 = vmatpush1.msra.mxu0 0.0
    %122 = vmatprep.subr.mxu0 0.0
    %123 = vmatpush1.msra.mxu0 0.0
    %124 = vmatprep.subr.mxu0 0.0
    %125 = vmatpush1.msra.mxu0 0.0
    %126 = vmatprep.subr.mxu0 0.0
    %127 = vmatpush1.msra.mxu0 0.0
    %128 = vmatprep.subr.mxu0 0.0
    %129 = vmatpush1.msra.mxu0 0.0
    %130 = vmatprep.subr.mxu0 0.0
    %131 = vmatpush1.msra.mxu0 0.0
    %132 = vmatprep.subr.mxu0 0.0
    %133 = vmatpush1.msra.mxu0 0.0
    %134 = vmatprep.subr.mxu0 0.0
    %135 = vmatpush1.msra.mxu0 0.0
    %136 = vmatprep.subr.mxu0 0.0
    %137 = vmatpush1.msra.mxu0 0.0
    %138 = vmatprep.subr.mxu0 0.0
    %139 = vmatpush1.msra.mxu0 0.0
    %140 = vmatprep.subr.mxu0 0.0
    %141 = vmatpush1.msra.mxu0 0.0
    %142 = vmatprep.subr.mxu0 0.0
    %143 = vmatpush1.msra.mxu0 0.0
    %144 = vmatprep.subr.mxu0 0.0
    %145 = vmatpush1.msra.mxu0 0.0
    %146 = vmatprep.subr.mxu0 0.0
    %147 = vmatpush1.msra.mxu0 0.0
    %148 = vmatprep.subr.mxu0 0.0
    %149 = vmatpush1.msra.mxu0 0.0
    %150 = vmatprep.subr.mxu0 0.0
    %151 = vmatpush1.msra.mxu0 0.0
    %152 = vmatprep.subr.mxu0 0.0
    %153 = vmatpush1.msra.mxu0 0.0
    %154 = vmatprep.subr.mxu0 0.0
    %155 = vmatpush1.msra.mxu0 0.0
    %156 = vmatprep.subr.mxu0 0.0
    %157 = vmatpush1.msra.mxu0 0.0
    %158 = vmatprep.subr.mxu0 0.0
    %159 = vmatpush1.msra.mxu0 0.0
    %160 = vmatprep.subr.mxu0 0.0
    %161 = vmatpush1.msra.mxu0 0.0
    %162 = vmatprep.subr.mxu0 0.0
    %163 = vmatpush1.msra.mxu0 0.0
    %164 = vmatprep.mubr.f32.mxu0 0.0
    %165 = vmatmul.mubr.f32.gmra.mrb[0].mxu0 %v95
    %v166 = vpop.f32.mrb[0].mxu0
    %v167 = vadd.f32 %v91, %v166
    %v168 = vpop.f32.mrb[0].mxu0
    %169 = vmatprep.mubr.f32.mxu0 0.0
    %170 = vmatmul.mubr.f32.gmra.mrb[0].mxu0 %v98
    %v171 = vpop.f32.mrb[0].mxu0
    %v172 = vadd.f32 %v91, %v171
    %v173 = vpop.f32.mrb[0].mxu0
    %174 = vdwg.mxu0
    %v175 = vmax.f32 %v167, 0.0
    %v176 = vmax.f32 %v172, 0.0
    %v177 = vld [vmem:[#allocation6] sm:$0xff]
    %v178 = vld [vmem:[#allocation6 + $0x8] sm:$0xff]
    %v179 = vld [vmem:[#allocation6 + $0x10] sm:$0xff]
    %v180 = vld [vmem:[#allocation6 + $0x18] sm:$0xff]
    %v181 = vld [vmem:[%s4] sm:$0x1]
    %v183 = vlaneseq
    %v184 = vshrl.u32 %v183, 7
    %v185 = vsub.s32 0, %v184
    %v186 = vrot.slane %v181, %v185
    %vm188 = vcmask 261120
    %v190 = vsel %vm188, %v175, 0
    %v193 = vsel %vm188, %v176, 0
    %195 = vmatprep.subr.mxu0 0.0
    %196 = vmatpush1.msra.mxu0 %v177
    %197 = vmatprep.subr.mxu0 0.0
    %198 = vmatpush1.msra.mxu0 %v178
    %199 = vmatprep.subr.mxu0 0.0
    %200 = vmatpush1.msra.mxu0 %v179
    %201 = vmatprep.subr.mxu0 0.0
    %202 = vmatpush1.msra.mxu0 %v180
    %203 = vmatprep.subr.mxu0 0.0
    %204 = vmatpush1.msra.mxu0 0.0
    %205 = vmatprep.subr.mxu0 0.0
    %206 = vmatpush1.msra.mxu0 0.0
    %207 = vmatprep.subr.mxu0 0.0
    %208 = vmatpush1.msra.mxu0 0.0
    %209 = vmatprep.subr.mxu0 0.0
    %210 = vmatpush1.msra.mxu0 0.0
    %211 = vmatprep.subr.mxu0 0.0
    %212 = vmatpush1.msra.mxu0 0.0
    %213 = vmatprep.subr.mxu0 0.0
    %214 = vmatpush1.msra.mxu0 0.0
    %215 = vmatprep.subr.mxu0 0.0
    %216 = vmatpush1.msra.mxu0 0.0
    %217 = vmatprep.subr.mxu0 0.0
    %218 = vmatpush1.msra.mxu0 0.0
    %219 = vmatprep.subr.mxu0 0.0
    %220 = vmatpush1.msra.mxu0 0.0
    %221 = vmatprep.subr.mxu0 0.0
    %222 = vmatpush1.msra.mxu0 0.0
    %223 = vmatprep.subr.mxu0 0.0
    %224 = vmatpush1.msra.mxu0 0.0
    %225 = vmatprep.subr.mxu0 0.0
    %226 = vmatpush1.msra.mxu0 0.0
    %227 = vmatprep.subr.mxu0 0.0
    %228 = vmatpush1.msra.mxu0 0.0
    %229 = vmatprep.subr.mxu0 0.0
    %230 = vmatpush1.msra.mxu0 0.0
    %231 = vmatprep.subr.mxu0 0.0
    %232 = vmatpush1.msra.mxu0 0.0
    %233 = vmatprep.subr.mxu0 0.0
    %234 = vmatpush1.msra.mxu0 0.0
    %235 = vmatprep.subr.mxu0 0.0
    %236 = vmatpush1.msra.mxu0 0.0
    %237 = vmatprep.subr.mxu0 0.0
    %238 = vmatpush1.msra.mxu0 0.0
    %239 = vmatprep.subr.mxu0 0.0
    %240 = vmatpush1.msra.mxu0 0.0
    %241 = vmatprep.subr.mxu0 0.0
    %242 = vmatpush1.msra.mxu0 0.0
    %243 = vmatprep.subr.mxu0 0.0
    %244 = vmatpush1.msra.mxu0 0.0
    %245 = vmatprep.subr.mxu0 0.0
    %246 = vmatpush1.msra.mxu0 0.0
    %247 = vmatprep.subr.mxu0 0.0
    %248 = vmatpush1.msra.mxu0 0.0
    %249 = vmatprep.subr.mxu0 0.0
    %250 = vmatpush1.msra.mxu0 0.0
    %251 = vmatprep.subr.mxu0 0.0
    %252 = vmatpush1.msra.mxu0 0.0
    %253 = vmatprep.subr.mxu0 0.0
    %254 = vmatpush1.msra.mxu0 0.0
    %255 = vmatprep.subr.mxu0 0.0
    %256 = vmatpush1.msra.mxu0 0.0
    %257 = vmatprep.subr.mxu0 0.0
    %258 = vmatpush1.msra.mxu0 0.0
    %259 = vmatprep.mubr.f32.mxu0 0.0
    %260 = vmatmul.mubr.f32.gmra.mrb[0].mxu0 %v190
    %v261 = vpop.f32.mrb[0].mxu0
    %v262 = vadd.f32 %v186, %v261
    %v263 = vpop.f32.mrb[0].mxu0
    %264 = vmatprep.mubr.f32.mxu0 0.0
    %265 = vmatmul.mubr.f32.gmra.mrb[0].mxu0 %v193
    %v266 = vpop.f32.mrb[0].mxu0
    %v267 = vadd.f32 %v186, %v266
    %v268 = vpop.f32.mrb[0].mxu0
    %269 = vdwg.mxu0
    %v270 = vmax.f32 %v262, 0.0
    %v271 = vmax.f32 %v267, 0.0
    %v272 = vld [vmem:[#allocation7] sm:$0xff]
    %v273 = vld [vmem:[#allocation7 + $0x8] sm:$0xff]
    %v274 = vld [vmem:[#allocation7 + $0x10] sm:$0xff]
    %v275 = vld [vmem:[#allocation7 + $0x18] sm:$0xff]
    %v276 = vld [vmem:[%s6] sm:$0x1]
    %v278 = vlaneseq
    %v279 = vshrl.u32 %v278, 7
    %v280 = vsub.s32 0, %v279
    %v281 = vrot.slane %v276, %v280
    %v284 = vsel %vm188, %v270, 0
    %v287 = vsel %vm188, %v271, 0
    %289 = vmatprep.subr.mxu0 0.0
    %290 = vmatpush1.msra.mxu0 %v272
    %291 = vmatprep.subr.mxu0 0.0
    %292 = vmatpush1.msra.mxu0 %v273
    %293 = vmatprep.subr.mxu0 0.0
    %294 = vmatpush1.msra.mxu0 %v274
    %295 = vmatprep.subr.mxu0 0.0
    %296 = vmatpush1.msra.mxu0 %v275
    %297 = vmatprep.subr.mxu0 0.0
    %298 = vmatpush1.msra.mxu0 0.0
    %299 = vmatprep.subr.mxu0 0.0
    %300 = vmatpush1.msra.mxu0 0.0
    %301 = vmatprep.subr.mxu0 0.0
    %302 = vmatpush1.msra.mxu0 0.0
    %303 = vmatprep.subr.mxu0 0.0
    %304 = vmatpush1.msra.mxu0 0.0
    %305 = vmatprep.subr.mxu0 0.0
    %306 = vmatpush1.msra.mxu0 0.0
    %307 = vmatprep.subr.mxu0 0.0
    %308 = vmatpush1.msra.mxu0 0.0
    %309 = vmatprep.subr.mxu0 0.0
    %310 = vmatpush1.msra.mxu0 0.0
    %311 = vmatprep.subr.mxu0 0.0
    %312 = vmatpush1.msra.mxu0 0.0
    %313 = vmatprep.subr.mxu0 0.0
    %314 = vmatpush1.msra.mxu0 0.0
    %315 = vmatprep.subr.mxu0 0.0
    %316 = vmatpush1.msra.mxu0 0.0
    %317 = vmatprep.subr.mxu0 0.0
    %318 = vmatpush1.msra.mxu0 0.0
    %319 = vmatprep.subr.mxu0 0.0
    %320 = vmatpush1.msra.mxu0 0.0
    %321 = vmatprep.subr.mxu0 0.0
    %322 = vmatpush1.msra.mxu0 0.0
    %323 = vmatprep.subr.mxu0 0.0
    %324 = vmatpush1.msra.mxu0 0.0
    %325 = vmatprep.subr.mxu0 0.0
    %326 = vmatpush1.msra.mxu0 0.0
    %327 = vmatprep.subr.mxu0 0.0
    %328 = vmatpush1.msra.mxu0 0.0
    %329 = vmatprep.subr.mxu0 0.0
    %330 = vmatpush1.msra.mxu0 0.0
    %331 = vmatprep.subr.mxu0 0.0
    %332 = vmatpush1.msra.mxu0 0.0
    %333 = vmatprep.subr.mxu0 0.0
    %334 = vmatpush1.msra.mxu0 0.0
    %335 = vmatprep.subr.mxu0 0.0
    %336 = vmatpush1.msra.mxu0 0.0
    %337 = vmatprep.subr.mxu0 0.0
    %338 = vmatpush1.msra.mxu0 0.0
    %339 = vmatprep.subr.mxu0 0.0
    %340 = vmatpush1.msra.mxu0 0.0
    %341 = vmatprep.subr.mxu0 0.0
    %342 = vmatpush1.msra.mxu0 0.0
    %343 = vmatprep.subr.mxu0 0.0
    %344 = vmatpush1.msra.mxu0 0.0
    %345 = vmatprep.subr.mxu0 0.0
    %346 = vmatpush1.msra.mxu0 0.0
    %347 = vmatprep.subr.mxu0 0.0
    %348 = vmatpush1.msra.mxu0 0.0
    %349 = vmatprep.subr.mxu0 0.0
    %350 = vmatpush1.msra.mxu0 0.0
    %351 = vmatprep.subr.mxu0 0.0
    %352 = vmatpush1.msra.mxu0 0.0
    %353 = vmatprep.mubr.f32.mxu0 0.0
    %354 = vmatmul.mubr.f32.gmra.mrb[0].mxu0 %v284
    %v355 = vpop.f32.mrb[0].mxu0
    %v356 = vadd.f32 %v281, %v355
    %v357 = vpop.f32.mrb[0].mxu0
    %358 = vmatprep.mubr.f32.mxu0 0.0
    %359 = vmatmul.mubr.f32.gmra.mrb[0].mxu0 %v287
    %v360 = vpop.f32.mrb[0].mxu0
    %v361 = vadd.f32 %v281, %v360
    %v362 = vpop.f32.mrb[0].mxu0
    %363 = vdwg.mxu0
    %364 = vst [vmem:[%s7] sm:$0xff] %v356
    %365 = vst [vmem:[%s7 + $0x8] sm:$0xff] %v361
    // Predicated region
    $region46: #{mlp_critic_forward.1} parent=1 // pred_check
      _
    $region47: #{mlp_critic_forward.1} parent=1 // pred_check_branch
      %367 = sbr.rel (0) target = $region49
    $region48: #{mlp_critic_forward.1} parent=1 // pred_region
      _
    $region49: #{mlp_critic_forward.1} parent=1 // pred_fallthru
      _
    // Predicated region
    $region50: #{mlp_critic_forward.1} parent=1 // pred_check
      _
    $region51: #{mlp_critic_forward.1} parent=1 // pred_check_branch
      %369 = sbr.rel (0) target = $region53
    $region52: #{mlp_critic_forward.1} parent=1 // pred_region
      _
    $region53: #{mlp_critic_forward.1} parent=1 // pred_fallthru
      _
    %370 = vsyncpa [#allocation3], 1
    %371 = vsyncpa [#allocation5], 1
    %372 = vsyncpa [#allocation8], 1

</llo_original>
